<compile_context>
chip_gen: v6e
topology: v6e:2x2x1
jax: 0.10.0
libtpu: 0.0.40
codegen_flags: <defaults>
</compile_context>

<pallas_src>
import functools

import jax
import jax.numpy as jnp
from jax.experimental import pallas as pl
from jax.experimental.pallas import tpu as pltpu


# ---------------------------------------------------------------------------
# Small-channel path: VPU broadcast-FMAs, spatial in (sublane, lane).
# ---------------------------------------------------------------------------
def _pointwise_conv_kernel(w_ref, b_ref, x_ref, o_ref, *, compute_dtype):
    """One (Nb, Cin, tr, 128) input block -> (Nb, Cout, tr, 128) output block.

    w_ref : (Cout*Cin,) f32, SMEM (flattened weight, scalar reads)
    b_ref : (Cout,)     f32, SMEM
    x_ref : (Nb, Cin, tr, 128) VMEM block (spatial lane-dense)
    o_ref : (Nb, Cout, tr, 128) VMEM block
    """
    nb = x_ref.shape[0]
    cin = x_ref.shape[1]
    cout = o_ref.shape[1]

    for n in range(nb):
        # Load each input-channel plane once. bf16 stays bf16 (packed vregs,
        # half the VALU cycles, no f32 temporaries); f32 stays f32.
        xs = [x_ref[n, c, :, :].astype(compute_dtype) for c in range(cin)]
        # y_o = sum_c w[o,c] * x_c + b[o] -- unrolled VPU broadcast-FMAs.
        for o in range(cout):
            acc = xs[0] * w_ref[o * cin + 0].astype(compute_dtype)
            for c in range(1, cin):
                acc = acc + xs[c] * w_ref[o * cin + c].astype(compute_dtype)
            acc = acc + b_ref[o].astype(compute_dtype)
            o_ref[n, o, :, :] = acc.astype(o_ref.dtype)


def _mlp_conv1x1_vpu(x_nchw, weight, bias, *, max_row_tile):
    N, Cin, H, W = x_nchw.shape
    Cout = weight.shape[0]
    S = H * W
    lanes = 128
    out_dtype = x_nchw.dtype

    # --- spatial layout: always a lane-dense (rows, 128) grid ---------------
    if S % lanes == 0:
        rows = S // lanes
        pad = 0
        x4 = x_nchw.reshape(N, Cin, rows, lanes)      # metadata-only reshape
    else:
        # Pad flattened spatial dim up to a multiple of 128 once in the
        # wrapper (replaces the fragile single-sublane (1, S) fallback).
        rows = pl.cdiv(S, lanes)
        pad = rows * lanes - S
        x4 = jnp.pad(x_nchw.reshape(N, Cin, S), ((0, 0), (0, 0), (0, pad)))
        x4 = x4.reshape(N, Cin, rows, lanes)

    # --- tiny parameter tensors -> f32, flattened, SMEM ----------------------
    w_flat = weight.reshape(Cout * Cin).astype(jnp.float32)
    b1d = bias.reshape(Cout).astype(jnp.float32)

    compute_dtype = (
        jnp.bfloat16 if x_nchw.dtype == jnp.bfloat16 else jnp.float32
    )

    # --- row tile from an explicit VMEM budget (double-buffered in+out) -----
    itemsize_in = jnp.dtype(x_nchw.dtype).itemsize
    itemsize_out = jnp.dtype(out_dtype).itemsize
    per_row_bytes = lanes * (Cin * itemsize_in + Cout * itemsize_out)
    vmem_budget = 24 << 20            # safe on v7x (64 MiB phys / 32 MiB scoped)
    tr_cap = max(8, ((vmem_budget // (2 * per_row_bytes)) // 8) * 8)
    tr_cap = min(tr_cap, max_row_tile)
    if rows <= tr_cap:
        tr = rows                      # full extent block (no (8,128) issue)
    else:
        tr = tr_cap                    # multiple of 8; ragged last block masked

    # --- batch folding for tiny feature maps (amortize per-step overhead) ---
    if rows < 8 and N > 1:
        Nb = min(N, max(1, 16 // rows))
    else:
        Nb = 1

    num_batch_blocks = pl.cdiv(N, Nb)
    num_row_blocks = pl.cdiv(rows, tr)

    # --- make sure a v7x megacore (2 TCs) gets >= 2 blocks when worthwhile --
    if num_batch_blocks * num_row_blocks < 2 and rows >= 16:
        tr = max(8, (((rows + 1) // 2 + 7) // 8) * 8)
        num_row_blocks = pl.cdiv(rows, tr)

    grid = (num_batch_blocks, num_row_blocks)

    # --- pin the scoped VMEM limit to the actual footprint -------------------
    footprint = 2 * Nb * tr * per_row_bytes        # double-buffered in + out
    vmem_limit = int(min(32 << 20, max(footprint + (4 << 20), 16 << 20)))

    kernel = functools.partial(
        _pointwise_conv_kernel, compute_dtype=compute_dtype
    )

    out4 = pl.pallas_call(
        kernel,
        out_shape=jax.ShapeDtypeStruct((N, Cout, rows, lanes), out_dtype),
        grid_spec=pltpu.PrefetchScalarGridSpec(
            num_scalar_prefetch=0,
            grid=grid,
            in_specs=[
                pl.BlockSpec(memory_space=pltpu.MemorySpace.SMEM),  # weight
                pl.BlockSpec(memory_space=pltpu.MemorySpace.SMEM),  # bias
                pl.BlockSpec((Nb, Cin, tr, lanes), lambda n, r: (n, 0, r, 0)),
            ],
            out_specs=pl.BlockSpec(
                (Nb, Cout, tr, lanes), lambda n, r: (n, 0, r, 0)
            ),
        ),
        compiler_params=pltpu.CompilerParams(
            dimension_semantics=("parallel", "parallel"),
            vmem_limit_bytes=vmem_limit,
        ),
    )(w_flat, b1d, x4)

    if pad:
        out = out4.reshape(N, Cout, rows * lanes)[:, :, :S].reshape(
            N, Cout, H, W
        )
    else:
        out = out4.reshape(N, Cout, H, W)
    return out


# ---------------------------------------------------------------------------
# Large-channel path: MXU matmul (channels in the lane dim).
# ---------------------------------------------------------------------------
def _mxu_conv1x1_kernel(x_ref, w_ref, b_ref, o_ref):
    # x_ref: (tm, Cin), w_ref: (Cin, Cout), b_ref: (1, Cout) -> o_ref: (tm, Cout)
    acc = jnp.dot(x_ref[...], w_ref[...], preferred_element_type=jnp.float32)
    o_ref[...] = (acc + b_ref[...]).astype(o_ref.dtype)


def _mlp_conv1x1_mxu(x_nchw, weight, bias, *, max_m_tile=512):
    N, Cin, H, W = x_nchw.shape
    Cout = weight.shape[0]
    M = N * H * W

    # Channels-last so the contraction dim sits in lanes for the MXU.
    x2 = jnp.transpose(x_nchw, (0, 2, 3, 1)).reshape(M, Cin)
    wt = weight.reshape(Cout, Cin).T.astype(x_nchw.dtype)    # (Cin, Cout)
    b2 = bias.reshape(1, Cout).astype(jnp.float32)

    tm = M if M <= max_m_tile else (max_m_tile // 8) * 8
    grid = (pl.cdiv(M, tm),)

    out2 = pl.pallas_call(
        _mxu_conv1x1_kernel,
        out_shape=jax.ShapeDtypeStruct((M, Cout), x_nchw.dtype),
        grid_spec=pltpu.PrefetchScalarGridSpec(
            num_scalar_prefetch=0,
            grid=grid,
            in_specs=[
                pl.BlockSpec((tm, Cin), lambda i: (i, 0)),
                pl.BlockSpec((Cin, Cout), lambda i: (0, 0)),
                pl.BlockSpec((1, Cout), lambda i: (0, 0)),
            ],
            out_specs=pl.BlockSpec((tm, Cout), lambda i: (i, 0)),
        ),
        compiler_params=pltpu.CompilerParams(
            dimension_semantics=("parallel",),
        ),
    )(x2, wt, b2)

    return out2.reshape(N, H, W, Cout).transpose(0, 3, 1, 2)


# ---------------------------------------------------------------------------
# Public entry point (matches nn.Conv2d(Cin, Cout, (1,1), bias=True) forward).
# ---------------------------------------------------------------------------
@functools.partial(jax.jit, static_argnames=("max_row_tile",))
def mlp_conv1x1(x_nchw, weight, bias, *, max_row_tile=1024):
    """x_nchw: (N, Cin, H, W); weight: (Cout, Cin, 1, 1); bias: (Cout,)."""
    _, Cin, _, _ = x_nchw.shape
    Cout = weight.shape[0]
    # Guarded dispatch: the unrolled VPU formulation scales as Cin*Cout VALU
    # ops per pixel; hand large channel counts to the MXU instead of cliffing.
    if Cin * Cout > 512 or Cin >= 64:
        return _mlp_conv1x1_mxu(x_nchw, weight, bias)
    return _mlp_conv1x1_vpu(x_nchw, weight, bias, max_row_tile=max_row_tile)


def _reference(x_nchw, weight, bias):
    # Pure-JAX reference (f32 einsum over the channel dim).
    w2d = weight.reshape(weight.shape[0], weight.shape[1])  # (Cout, Cin)
    y = jnp.einsum(
        "nchw,oc->nohw", x_nchw.astype(jnp.float32), w2d.astype(jnp.float32)
    ) + bias.astype(jnp.float32)[None, :, None, None]
    return y


if __name__ == "__main__":
    key = jax.random.PRNGKey(0)
    k_x, k_w, k_b, k_x2, k_w2, k_b2 = jax.random.split(key, 6)

    # ---- Primary case: AdaptiveMultiScale MLP shapes (small channels) ------
    N, Cin, Hs, Ws = 2, 4, 16, 16
    Cout = 8
    x = jax.random.normal(k_x, (N, Cin, Hs, Ws), dtype=jnp.float32)
    fan_in = Cin * 1 * 1
    bound = 1.0 / (fan_in ** 0.5)
    weight = jax.random.uniform(k_w, (Cout, Cin, 1, 1), jnp.float32, -bound, bound)
    bias = jax.random.uniform(k_b, (Cout,), jnp.float32, -bound, bound)

    out = jax.block_until_ready(mlp_conv1x1(x, weight, bias))
    ref = _reference(x, weight, bias)
    assert out.shape == (N, Cout, Hs, Ws), out.shape
    assert jnp.allclose(out, ref, atol=1e-5, rtol=1e-5), float(
        jnp.max(jnp.abs(out - ref))
    )

    # ---- bf16 input: bf16 MAC chain in-kernel -------------------------------
    xb = x.astype(jnp.bfloat16)
    out_b = jax.block_until_ready(mlp_conv1x1(xb, weight, bias))
    assert out_b.dtype == jnp.bfloat16
    assert jnp.allclose(out_b.astype(jnp.float32), ref, atol=1e-1, rtol=1e-1), float(
        jnp.max(jnp.abs(out_b.astype(jnp.float32) - ref))
    )

    # ---- Odd spatial size: padded lane-dense layout -------------------------
    x_odd = jax.random.normal(k_x2, (3, Cin, 9, 13), dtype=jnp.float32)
    out_odd = jax.block_until_ready(mlp_conv1x1(x_odd, weight, bias))
    ref_odd = _reference(x_odd, weight, bias)
    assert out_odd.shape == (3, Cout, 9, 13), out_odd.shape
    assert jnp.allclose(out_odd, ref_odd, atol=1e-5, rtol=1e-5), float(
        jnp.max(jnp.abs(out_odd - ref_odd))
    )

    # ---- Large-channel path (MXU dispatch) ----------------------------------
    Cin2, Cout2 = 32, 32
    x_big = jax.random.normal(k_x2, (1, Cin2, 8, 8), dtype=jnp.float32)
    w_big = jax.random.uniform(k_w2, (Cout2, Cin2, 1, 1), jnp.float32, -0.1, 0.1)
    b_big = jax.random.uniform(k_b2, (Cout2,), jnp.float32, -0.1, 0.1)
    out_big = jax.block_until_ready(mlp_conv1x1(x_big, w_big, b_big))
    ref_big = _reference(x_big, w_big, b_big)
    assert jnp.allclose(out_big, ref_big, atol=1e-4, rtol=1e-4), float(
        jnp.max(jnp.abs(out_big - ref_big))
    )

    print("KERNEL_OK")
</pallas_src>

<mosaic_0001>
module attributes {stable_mosaic.version = 11 : i64} {
  func.func @_pointwise_conv_kernel(%arg0: i32, %arg1: i32, %arg2: memref<32xf32, #tpu.memory_space<smem>>, %arg3: memref<8xf32, #tpu.memory_space<smem>>, %arg4: memref<2x4x2x128xf32, #tpu.memory_space<vmem>>, %arg5: memref<2x8x2x128xf32, #tpu.memory_space<vmem>>) attributes {dimension_semantics = [#tpu.dimension_semantics<parallel>, #tpu.dimension_semantics<parallel>], iteration_bounds = array<i64: 1, 1>, scalar_prefetch = 0 : i64, scratch_operands = 0 : i64, tpu.core_type = #tpu.core_type<tc>, window_params = [{transform_indices = @transform_0, window_bounds = array<i64: 32>}, {transform_indices = @transform_1, window_bounds = array<i64: 8>}, {transform_indices = @transform_2, window_bounds = array<i64: 2, 4, 2, 128>}, {transform_indices = @transform_3, window_bounds = array<i64: 2, 8, 2, 128>}]} {
    %c0 = arith.constant 0 : index
    %c0_0 = arith.constant 0 : index
    %c0_1 = arith.constant 0 : index
    %c0_2 = arith.constant 0 : index
    %0 = vector.load %arg4[%c0, %c0_0, %c0_1, %c0_2] : memref<2x4x2x128xf32, #tpu.memory_space<vmem>>, vector<1x1x2x128xf32>
    %1 = vector.shape_cast %0 : vector<1x1x2x128xf32> to vector<2x128xf32>
    %c0_3 = arith.constant 0 : index
    %c1 = arith.constant 1 : index
    %c0_4 = arith.constant 0 : index
    %c0_5 = arith.constant 0 : index
    %2 = vector.load %arg4[%c0_3, %c1, %c0_4, %c0_5] : memref<2x4x2x128xf32, #tpu.memory_space<vmem>>, vector<1x1x2x128xf32>
    %3 = vector.shape_cast %2 : vector<1x1x2x128xf32> to vector<2x128xf32>
    %c0_6 = arith.constant 0 : index
    %c2 = arith.constant 2 : index
    %c0_7 = arith.constant 0 : index
    %c0_8 = arith.constant 0 : index
    %4 = vector.load %arg4[%c0_6, %c2, %c0_7, %c0_8] : memref<2x4x2x128xf32, #tpu.memory_space<vmem>>, vector<1x1x2x128xf32>
    %5 = vector.shape_cast %4 : vector<1x1x2x128xf32> to vector<2x128xf32>
    %c0_9 = arith.constant 0 : index
    %c3 = arith.constant 3 : index
    %c0_10 = arith.constant 0 : index
    %c0_11 = arith.constant 0 : index
    %6 = vector.load %arg4[%c0_9, %c3, %c0_10, %c0_11] : memref<2x4x2x128xf32, #tpu.memory_space<vmem>>, vector<1x1x2x128xf32>
    %7 = vector.shape_cast %6 : vector<1x1x2x128xf32> to vector<2x128xf32>
    %c0_12 = arith.constant 0 : index
    %8 = memref.load %arg2[%c0_12] : memref<32xf32, #tpu.memory_space<smem>>
    %9 = vector.broadcast %8 : f32 to vector<2x128xf32>
    %10 = arith.mulf %1, %9 : vector<2x128xf32>
    %c1_13 = arith.constant 1 : index
    %11 = memref.load %arg2[%c1_13] : memref<32xf32, #tpu.memory_space<smem>>
    %12 = vector.broadcast %11 : f32 to vector<2x128xf32>
    %13 = arith.mulf %3, %12 : vector<2x128xf32>
    %14 = arith.addf %10, %13 : vector<2x128xf32>
    %c2_14 = arith.constant 2 : index
    %15 = memref.load %arg2[%c2_14] : memref<32xf32, #tpu.memory_space<smem>>
    %16 = vector.broadcast %15 : f32 to vector<2x128xf32>
    %17 = arith.mulf %5, %16 : vector<2x128xf32>
    %18 = arith.addf %14, %17 : vector<2x128xf32>
    %c3_15 = arith.constant 3 : index
    %19 = memref.load %arg2[%c3_15] : memref<32xf32, #tpu.memory_space<smem>>
    %20 = vector.broadcast %19 : f32 to vector<2x128xf32>
    %21 = arith.mulf %7, %20 : vector<2x128xf32>
    %22 = arith.addf %18, %21 : vector<2x128xf32>
    %c0_16 = arith.constant 0 : index
    %23 = memref.load %arg3[%c0_16] : memref<8xf32, #tpu.memory_space<smem>>
    %24 = vector.broadcast %23 : f32 to vector<2x128xf32>
    %25 = arith.addf %22, %24 : vector<2x128xf32>
    %c0_17 = arith.constant 0 : index
    %c0_18 = arith.constant 0 : index
    %c0_19 = arith.constant 0 : index
    %c0_20 = arith.constant 0 : index
    %26 = vector.load %arg5[%c0_17, %c0_18, %c0_19, %c0_20] : memref<2x8x2x128xf32, #tpu.memory_space<vmem>>, vector<1x1x2x128xf32>
    %27 = vector.shape_cast %26 : vector<1x1x2x128xf32> to vector<2x128xf32>
    %28 = vector.shape_cast %25 : vector<2x128xf32> to vector<1x1x2x128xf32>
    tpu.vector_store %arg5[%c0_17, %c0_18, %c0_19, %c0_20], %28 {strides = array<i32>} : memref<2x8x2x128xf32, #tpu.memory_space<vmem>>, vector<1x1x2x128xf32>,
    %c4 = arith.constant 4 : index
    %29 = memref.load %arg2[%c4] : memref<32xf32, #tpu.memory_space<smem>>
    %30 = vector.broadcast %29 : f32 to vector<2x128xf32>
    %31 = arith.mulf %1, %30 : vector<2x128xf32>
    %c5 = arith.constant 5 : index
    %32 = memref.load %arg2[%c5] : memref<32xf32, #tpu.memory_space<smem>>
    %33 = vector.broadcast %32 : f32 to vector<2x128xf32>
    %34 = arith.mulf %3, %33 : vector<2x128xf32>
    %35 = arith.addf %31, %34 : vector<2x128xf32>
    %c6 = arith.constant 6 : index
    %36 = memref.load %arg2[%c6] : memref<32xf32, #tpu.memory_space<smem>>
    %37 = vector.broadcast %36 : f32 to vector<2x128xf32>
    %38 = arith.mulf %5, %37 : vector<2x128xf32>
    %39 = arith.addf %35, %38 : vector<2x128xf32>
    %c7 = arith.constant 7 : index
    %40 = memref.load %arg2[%c7] : memref<32xf32, #tpu.memory_space<smem>>
    %41 = vector.broadcast %40 : f32 to vector<2x128xf32>
    %42 = arith.mulf %7, %41 : vector<2x128xf32>
    %43 = arith.addf %39, %42 : vector<2x128xf32>
    %c1_21 = arith.constant 1 : index
    %44 = memref.load %arg3[%c1_21] : memref<8xf32, #tpu.memory_space<smem>>
    %45 = vector.broadcast %44 : f32 to vector<2x128xf32>
    %46 = arith.addf %43, %45 : vector<2x128xf32>
    %c0_22 = arith.constant 0 : index
    %c1_23 = arith.constant 1 : index
    %c0_24 = arith.constant 0 : index
    %c0_25 = arith.constant 0 : index
    %47 = vector.load %arg5[%c0_22, %c1_23, %c0_24, %c0_25] : memref<2x8x2x128xf32, #tpu.memory_space<vmem>>, vector<1x1x2x128xf32>
    %48 = vector.shape_cast %47 : vector<1x1x2x128xf32> to vector<2x128xf32>
    %49 = vector.shape_cast %46 : vector<2x128xf32> to vector<1x1x2x128xf32>
    tpu.vector_store %arg5[%c0_22, %c1_23, %c0_24, %c0_25], %49 {strides = array<i32>} : memref<2x8x2x128xf32, #tpu.memory_space<vmem>>, vector<1x1x2x128xf32>,
    %c8 = arith.constant 8 : index
    %50 = memref.load %arg2[%c8] : memref<32xf32, #tpu.memory_space<smem>>
    %51 = vector.broadcast %50 : f32 to vector<2x128xf32>
    %52 = arith.mulf %1, %51 : vector<2x128xf32>
    %c9 = arith.constant 9 : index
    %53 = memref.load %arg2[%c9] : memref<32xf32, #tpu.memory_space<smem>>
    %54 = vector.broadcast %53 : f32 to vector<2x128xf32>
    %55 = arith.mulf %3, %54 : vector<2x128xf32>
    %56 = arith.addf %52, %55 : vector<2x128xf32>
    %c10 = arith.constant 10 : index
    %57 = memref.load %arg2[%c10] : memref<32xf32, #tpu.memory_space<smem>>
    %58 = vector.broadcast %57 : f32 to vector<2x128xf32>
    %59 = arith.mulf %5, %58 : vector<2x128xf32>
    %60 = arith.addf %56, %59 : vector<2x128xf32>
    %c11 = arith.constant 11 : index
    %61 = memref.load %arg2[%c11] : memref<32xf32, #tpu.memory_space<smem>>
    %62 = vector.broadcast %61 : f32 to vector<2x128xf32>
    %63 = arith.mulf %7, %62 : vector<2x128xf32>
    %64 = arith.addf %60, %63 : vector<2x128xf32>
    %c2_26 = arith.constant 2 : index
    %65 = memref.load %arg3[%c2_26] : memref<8xf32, #tpu.memory_space<smem>>
    %66 = vector.broadcast %65 : f32 to vector<2x128xf32>
    %67 = arith.addf %64, %66 : vector<2x128xf32>
    %c0_27 = arith.constant 0 : index
    %c2_28 = arith.constant 2 : index
    %c0_29 = arith.constant 0 : index
    %c0_30 = arith.constant 0 : index
    %68 = vector.load %arg5[%c0_27, %c2_28, %c0_29, %c0_30] : memref<2x8x2x128xf32, #tpu.memory_space<vmem>>, vector<1x1x2x128xf32>
    %69 = vector.shape_cast %68 : vector<1x1x2x128xf32> to vector<2x128xf32>
    %70 = vector.shape_cast %67 : vector<2x128xf32> to vector<1x1x2x128xf32>
    tpu.vector_store %arg5[%c0_27, %c2_28, %c0_29, %c0_30], %70 {strides = array<i32>} : memref<2x8x2x128xf32, #tpu.memory_space<vmem>>, vector<1x1x2x128xf32>,
    %c12 = arith.constant 12 : index
    %71 = memref.load %arg2[%c12] : memref<32xf32, #tpu.memory_space<smem>>
    %72 = vector.broadcast %71 : f32 to vector<2x128xf32>
    %73 = arith.mulf %1, %72 : vector<2x128xf32>
    %c13 = arith.constant 13 : index
    %74 = memref.load %arg2[%c13] : memref<32xf32, #tpu.memory_space<smem>>
    %75 = vector.broadcast %74 : f32 to vector<2x128xf32>
    %76 = arith.mulf %3, %75 : vector<2x128xf32>
    %77 = arith.addf %73, %76 : vector<2x128xf32>
    %c14 = arith.constant 14 : index
    %78 = memref.load %arg2[%c14] : memref<32xf32, #tpu.memory_space<smem>>
    %79 = vector.broadcast %78 : f32 to vector<2x128xf32>
    %80 = arith.mulf %5, %79 : vector<2x128xf32>
    %81 = arith.addf %77, %80 : vector<2x128xf32>
    %c15 = arith.constant 15 : index
    %82 = memref.load %arg2[%c15] : memref<32xf32, #tpu.memory_space<smem>>
    %83 = vector.broadcast %82 : f32 to vector<2x128xf32>
    %84 = arith.mulf %7, %83 : vector<2x128xf32>
    %85 = arith.addf %81, %84 : vector<2x128xf32>
    %c3_31 = arith.constant 3 : index
    %86 = memref.load %arg3[%c3_31] : memref<8xf32, #tpu.memory_space<smem>>
    %87 = vector.broadcast %86 : f32 to vector<2x128xf32>
    %88 = arith.addf %85, %87 : vector<2x128xf32>
    %c0_32 = arith.constant 0 : index
    %c3_33 = arith.constant 3 : index
    %c0_34 = arith.constant 0 : index
    %c0_35 = arith.constant 0 : index
    %89 = vector.load %arg5[%c0_32, %c3_33, %c0_34, %c0_35] : memref<2x8x2x128xf32, #tpu.memory_space<vmem>>, vector<1x1x2x128xf32>
    %90 = vector.shape_cast %89 : vector<1x1x2x128xf32> to vector<2x128xf32>
    %91 = vector.shape_cast %88 : vector<2x128xf32> to vector<1x1x2x128xf32>
    tpu.vector_store %arg5[%c0_32, %c3_33, %c0_34, %c0_35], %91 {strides = array<i32>} : memref<2x8x2x128xf32, #tpu.memory_space<vmem>>, vector<1x1x2x128xf32>,
    %c16 = arith.constant 16 : index
    %92 = memref.load %arg2[%c16] : memref<32xf32, #tpu.memory_space<smem>>
    %93 = vector.broadcast %92 : f32 to vector<2x128xf32>
    %94 = arith.mulf %1, %93 : vector<2x128xf32>
    %c17 = arith.constant 17 : index
    %95 = memref.load %arg2[%c17] : memref<32xf32, #tpu.memory_space<smem>>
    %96 = vector.broadcast %95 : f32 to vector<2x128xf32>
    %97 = arith.mulf %3, %96 : vector<2x128xf32>
    %98 = arith.addf %94, %97 : vector<2x128xf32>
    %c18 = arith.constant 18 : index
    %99 = memref.load %arg2[%c18] : memref<32xf32, #tpu.memory_space<smem>>
    %100 = vector.broadcast %99 : f32 to vector<2x128xf32>
    %101 = arith.mulf %5, %100 : vector<2x128xf32>
    %102 = arith.addf %98, %101 : vector<2x128xf32>
    %c19 = arith.constant 19 : index
    %103 = memref.load %arg2[%c19] : memref<32xf32, #tpu.memory_space<smem>>
    %104 = vector.broadcast %103 : f32 to vector<2x128xf32>
    %105 = arith.mulf %7, %104 : vector<2x128xf32>
    %106 = arith.addf %102, %105 : vector<2x128xf32>
    %c4_36 = arith.constant 4 : index
    %107 = memref.load %arg3[%c4_36] : memref<8xf32, #tpu.memory_space<smem>>
    %108 = vector.broadcast %107 : f32 to vector<2x128xf32>
    %109 = arith.addf %106, %108 : vector<2x128xf32>
    %c0_37 = arith.constant 0 : index
    %c4_38 = arith.constant 4 : index
    %c0_39 = arith.constant 0 : index
    %c0_40 = arith.constant 0 : index
    %110 = vector.load %arg5[%c0_37, %c4_38, %c0_39, %c0_40] : memref<2x8x2x128xf32, #tpu.memory_space<vmem>>, vector<1x1x2x128xf32>
    %111 = vector.shape_cast %110 : vector<1x1x2x128xf32> to vector<2x128xf32>
    %112 = vector.shape_cast %109 : vector<2x128xf32> to vector<1x1x2x128xf32>
    tpu.vector_store %arg5[%c0_37, %c4_38, %c0_39, %c0_40], %112 {strides = array<i32>} : memref<2x8x2x128xf32, #tpu.memory_space<vmem>>, vector<1x1x2x128xf32>,
    %c20 = arith.constant 20 : index
    %113 = memref.load %arg2[%c20] : memref<32xf32, #tpu.memory_space<smem>>
    %114 = vector.broadcast %113 : f32 to vector<2x128xf32>
    %115 = arith.mulf %1, %114 : vector<2x128xf32>
    %c21 = arith.constant 21 : index
    %116 = memref.load %arg2[%c21] : memref<32xf32, #tpu.memory_space<smem>>
    %117 = vector.broadcast %116 : f32 to vector<2x128xf32>
    %118 = arith.mulf %3, %117 : vector<2x128xf32>
    %119 = arith.addf %115, %118 : vector<2x128xf32>
    %c22 = arith.constant 22 : index
    %120 = memref.load %arg2[%c22] : memref<32xf32, #tpu.memory_space<smem>>
    %121 = vector.broadcast %120 : f32 to vector<2x128xf32>
    %122 = arith.mulf %5, %121 : vector<2x128xf32>
    %123 = arith.addf %119, %122 : vector<2x128xf32>
    %c23 = arith.constant 23 : index
    %124 = memref.load %arg2[%c23] : memref<32xf32, #tpu.memory_space<smem>>
    %125 = vector.broadcast %124 : f32 to vector<2x128xf32>
    %126 = arith.mulf %7, %125 : vector<2x128xf32>
    %127 = arith.addf %123, %126 : vector<2x128xf32>
    %c5_41 = arith.constant 5 : index
    %128 = memref.load %arg3[%c5_41] : memref<8xf32, #tpu.memory_space<smem>>
    %129 = vector.broadcast %128 : f32 to vector<2x128xf32>
    %130 = arith.addf %127, %129 : vector<2x128xf32>
    %c0_42 = arith.constant 0 : index
    %c5_43 = arith.constant 5 : index
    %c0_44 = arith.constant 0 : index
    %c0_45 = arith.constant 0 : index
    %131 = vector.load %arg5[%c0_42, %c5_43, %c0_44, %c0_45] : memref<2x8x2x128xf32, #tpu.memory_space<vmem>>, vector<1x1x2x128xf32>
    %132 = vector.shape_cast %131 : vector<1x1x2x128xf32> to vector<2x128xf32>
    %133 = vector.shape_cast %130 : vector<2x128xf32> to vector<1x1x2x128xf32>
    tpu.vector_store %arg5[%c0_42, %c5_43, %c0_44, %c0_45], %133 {strides = array<i32>} : memref<2x8x2x128xf32, #tpu.memory_space<vmem>>, vector<1x1x2x128xf32>,
    %c24 = arith.constant 24 : index
    %134 = memref.load %arg2[%c24] : memref<32xf32, #tpu.memory_space<smem>>
    %135 = vector.broadcast %134 : f32 to vector<2x128xf32>
    %136 = arith.mulf %1, %135 : vector<2x128xf32>
    %c25 = arith.constant 25 : index
    %137 = memref.load %arg2[%c25] : memref<32xf32, #tpu.memory_space<smem>>
    %138 = vector.broadcast %137 : f32 to vector<2x128xf32>
    %139 = arith.mulf %3, %138 : vector<2x128xf32>
    %140 = arith.addf %136, %139 : vector<2x128xf32>
    %c26 = arith.constant 26 : index
    %141 = memref.load %arg2[%c26] : memref<32xf32, #tpu.memory_space<smem>>
    %142 = vector.broadcast %141 : f32 to vector<2x128xf32>
    %143 = arith.mulf %5, %142 : vector<2x128xf32>
    %144 = arith.addf %140, %143 : vector<2x128xf32>
    %c27 = arith.constant 27 : index
    %145 = memref.load %arg2[%c27] : memref<32xf32, #tpu.memory_space<smem>>
    %146 = vector.broadcast %145 : f32 to vector<2x128xf32>
    %147 = arith.mulf %7, %146 : vector<2x128xf32>
    %148 = arith.addf %144, %147 : vector<2x128xf32>
    %c6_46 = arith.constant 6 : index
    %149 = memref.load %arg3[%c6_46] : memref<8xf32, #tpu.memory_space<smem>>
    %150 = vector.broadcast %149 : f32 to vector<2x128xf32>
    %151 = arith.addf %148, %150 : vector<2x128xf32>
    %c0_47 = arith.constant 0 : index
    %c6_48 = arith.constant 6 : index
    %c0_49 = arith.constant 0 : index
    %c0_50 = arith.constant 0 : index
    %152 = vector.load %arg5[%c0_47, %c6_48, %c0_49, %c0_50] : memref<2x8x2x128xf32, #tpu.memory_space<vmem>>, vector<1x1x2x128xf32>
    %153 = vector.shape_cast %152 : vector<1x1x2x128xf32> to vector<2x128xf32>
    %154 = vector.shape_cast %151 : vector<2x128xf32> to vector<1x1x2x128xf32>
    tpu.vector_store %arg5[%c0_47, %c6_48, %c0_49, %c0_50], %154 {strides = array<i32>} : memref<2x8x2x128xf32, #tpu.memory_space<vmem>>, vector<1x1x2x128xf32>,
    %c28 = arith.constant 28 : index
    %155 = memref.load %arg2[%c28] : memref<32xf32, #tpu.memory_space<smem>>
    %156 = vector.broadcast %155 : f32 to vector<2x128xf32>
    %157 = arith.mulf %1, %156 : vector<2x128xf32>
    %c29 = arith.constant 29 : index
    %158 = memref.load %arg2[%c29] : memref<32xf32, #tpu.memory_space<smem>>
    %159 = vector.broadcast %158 : f32 to vector<2x128xf32>
    %160 = arith.mulf %3, %159 : vector<2x128xf32>
    %161 = arith.addf %157, %160 : vector<2x128xf32>
    %c30 = arith.constant 30 : index
    %162 = memref.load %arg2[%c30] : memref<32xf32, #tpu.memory_space<smem>>
    %163 = vector.broadcast %162 : f32 to vector<2x128xf32>
    %164 = arith.mulf %5, %163 : vector<2x128xf32>
    %165 = arith.addf %161, %164 : vector<2x128xf32>
    %c31 = arith.constant 31 : index
    %166 = memref.load %arg2[%c31] : memref<32xf32, #tpu.memory_space<smem>>
    %167 = vector.broadcast %166 : f32 to vector<2x128xf32>
    %168 = arith.mulf %7, %167 : vector<2x128xf32>
    %169 = arith.addf %165, %168 : vector<2x128xf32>
    %c7_51 = arith.constant 7 : index
    %170 = memref.load %arg3[%c7_51] : memref<8xf32, #tpu.memory_space<smem>>
    %171 = vector.broadcast %170 : f32 to vector<2x128xf32>
    %172 = arith.addf %169, %171 : vector<2x128xf32>
    %c0_52 = arith.constant 0 : index
    %c7_53 = arith.constant 7 : index
    %c0_54 = arith.constant 0 : index
    %c0_55 = arith.constant 0 : index
    %173 = vector.load %arg5[%c0_52, %c7_53, %c0_54, %c0_55] : memref<2x8x2x128xf32, #tpu.memory_space<vmem>>, vector<1x1x2x128xf32>
    %174 = vector.shape_cast %173 : vector<1x1x2x128xf32> to vector<2x128xf32>
    %175 = vector.shape_cast %172 : vector<2x128xf32> to vector<1x1x2x128xf32>
    tpu.vector_store %arg5[%c0_52, %c7_53, %c0_54, %c0_55], %175 {strides = array<i32>} : memref<2x8x2x128xf32, #tpu.memory_space<vmem>>, vector<1x1x2x128xf32>,
    %c1_56 = arith.constant 1 : index
    %c0_57 = arith.constant 0 : index
    %c0_58 = arith.constant 0 : index
    %c0_59 = arith.constant 0 : index
    %176 = vector.load %arg4[%c1_56, %c0_57, %c0_58, %c0_59] : memref<2x4x2x128xf32, #tpu.memory_space<vmem>>, vector<1x1x2x128xf32>
    %177 = vector.shape_cast %176 : vector<1x1x2x128xf32> to vector<2x128xf32>
    %c1_60 = arith.constant 1 : index
    %c1_61 = arith.constant 1 : index
    %c0_62 = arith.constant 0 : index
    %c0_63 = arith.constant 0 : index
    %178 = vector.load %arg4[%c1_60, %c1_61, %c0_62, %c0_63] : memref<2x4x2x128xf32, #tpu.memory_space<vmem>>, vector<1x1x2x128xf32>
    %179 = vector.shape_cast %178 : vector<1x1x2x128xf32> to vector<2x128xf32>
    %c1_64 = arith.constant 1 : index
    %c2_65 = arith.constant 2 : index
    %c0_66 = arith.constant 0 : index
    %c0_67 = arith.constant 0 : index
    %180 = vector.load %arg4[%c1_64, %c2_65, %c0_66, %c0_67] : memref<2x4x2x128xf32, #tpu.memory_space<vmem>>, vector<1x1x2x128xf32>
    %181 = vector.shape_cast %180 : vector<1x1x2x128xf32> to vector<2x128xf32>
    %c1_68 = arith.constant 1 : index
    %c3_69 = arith.constant 3 : index
    %c0_70 = arith.constant 0 : index
    %c0_71 = arith.constant 0 : index
    %182 = vector.load %arg4[%c1_68, %c3_69, %c0_70, %c0_71] : memref<2x4x2x128xf32, #tpu.memory_space<vmem>>, vector<1x1x2x128xf32>
    %183 = vector.shape_cast %182 : vector<1x1x2x128xf32> to vector<2x128xf32>
    %c0_72 = arith.constant 0 : index
    %184 = memref.load %arg2[%c0_72] : memref<32xf32, #tpu.memory_space<smem>>
    %185 = vector.broadcast %184 : f32 to vector<2x128xf32>
    %186 = arith.mulf %177, %185 : vector<2x128xf32>
    %c1_73 = arith.constant 1 : index
    %187 = memref.load %arg2[%c1_73] : memref<32xf32, #tpu.memory_space<smem>>
    %188 = vector.broadcast %187 : f32 to vector<2x128xf32>
    %189 = arith.mulf %179, %188 : vector<2x128xf32>
    %190 = arith.addf %186, %189 : vector<2x128xf32>
    %c2_74 = arith.constant 2 : index
    %191 = memref.load %arg2[%c2_74] : memref<32xf32, #tpu.memory_space<smem>>
    %192 = vector.broadcast %191 : f32 to vector<2x128xf32>
    %193 = arith.mulf %181, %192 : vector<2x128xf32>
    %194 = arith.addf %190, %193 : vector<2x128xf32>
    %c3_75 = arith.constant 3 : index
    %195 = memref.load %arg2[%c3_75] : memref<32xf32, #tpu.memory_space<smem>>
    %196 = vector.broadcast %195 : f32 to vector<2x128xf32>
    %197 = arith.mulf %183, %196 : vector<2x128xf32>
    %198 = arith.addf %194, %197 : vector<2x128xf32>
    %c0_76 = arith.constant 0 : index
    %199 = memref.load %arg3[%c0_76] : memref<8xf32, #tpu.memory_space<smem>>
    %200 = vector.broadcast %199 : f32 to vector<2x128xf32>
    %201 = arith.addf %198, %200 : vector<2x128xf32>
    %c1_77 = arith.constant 1 : index
    %c0_78 = arith.constant 0 : index
    %c0_79 = arith.constant 0 : index
    %c0_80 = arith.constant 0 : index
    %202 = vector.load %arg5[%c1_77, %c0_78, %c0_79, %c0_80] : memref<2x8x2x128xf32, #tpu.memory_space<vmem>>, vector<1x1x2x128xf32>
    %203 = vector.shape_cast %202 : vector<1x1x2x128xf32> to vector<2x128xf32>
    %204 = vector.shape_cast %201 : vector<2x128xf32> to vector<1x1x2x128xf32>
    tpu.vector_store %arg5[%c1_77, %c0_78, %c0_79, %c0_80], %204 {strides = array<i32>} : memref<2x8x2x128xf32, #tpu.memory_space<vmem>>, vector<1x1x2x128xf32>,
    %c4_81 = arith.constant 4 : index
    %205 = memref.load %arg2[%c4_81] : memref<32xf32, #tpu.memory_space<smem>>
    %206 = vector.broadcast %205 : f32 to vector<2x128xf32>
    %207 = arith.mulf %177, %206 : vector<2x128xf32>
    %c5_82 = arith.constant 5 : index
    %208 = memref.load %arg2[%c5_82] : memref<32xf32, #tpu.memory_space<smem>>
    %209 = vector.broadcast %208 : f32 to vector<2x128xf32>
    %210 = arith.mulf %179, %209 : vector<2x128xf32>
    %211 = arith.addf %207, %210 : vector<2x128xf32>
    %c6_83 = arith.constant 6 : index
    %212 = memref.load %arg2[%c6_83] : memref<32xf32, #tpu.memory_space<smem>>
    %213 = vector.broadcast %212 : f32 to vector<2x128xf32>
    %214 = arith.mulf %181, %213 : vector<2x128xf32>
    %215 = arith.addf %211, %214 : vector<2x128xf32>
    %c7_84 = arith.constant 7 : index
    %216 = memref.load %arg2[%c7_84] : memref<32xf32, #tpu.memory_space<smem>>
    %217 = vector.broadcast %216 : f32 to vector<2x128xf32>
    %218 = arith.mulf %183, %217 : vector<2x128xf32>
    %219 = arith.addf %215, %218 : vector<2x128xf32>
    %c1_85 = arith.constant 1 : index
    %220 = memref.load %arg3[%c1_85] : memref<8xf32, #tpu.memory_space<smem>>
    %221 = vector.broadcast %220 : f32 to vector<2x128xf32>
    %222 = arith.addf %219, %221 : vector<2x128xf32>
    %c1_86 = arith.constant 1 : index
    %c1_87 = arith.constant 1 : index
    %c0_88 = arith.constant 0 : index
    %c0_89 = arith.constant 0 : index
    %223 = vector.load %arg5[%c1_86, %c1_87, %c0_88, %c0_89] : memref<2x8x2x128xf32, #tpu.memory_space<vmem>>, vector<1x1x2x128xf32>
    %224 = vector.shape_cast %223 : vector<1x1x2x128xf32> to vector<2x128xf32>
    %225 = vector.shape_cast %222 : vector<2x128xf32> to vector<1x1x2x128xf32>
    tpu.vector_store %arg5[%c1_86, %c1_87, %c0_88, %c0_89], %225 {strides = array<i32>} : memref<2x8x2x128xf32, #tpu.memory_space<vmem>>, vector<1x1x2x128xf32>,
    %c8_90 = arith.constant 8 : index
    %226 = memref.load %arg2[%c8_90] : memref<32xf32, #tpu.memory_space<smem>>
    %227 = vector.broadcast %226 : f32 to vector<2x128xf32>
    %228 = arith.mulf %177, %227 : vector<2x128xf32>
    %c9_91 = arith.constant 9 : index
    %229 = memref.load %arg2[%c9_91] : memref<32xf32, #tpu.memory_space<smem>>
    %230 = vector.broadcast %229 : f32 to vector<2x128xf32>
    %231 = arith.mulf %179, %230 : vector<2x128xf32>
    %232 = arith.addf %228, %231 : vector<2x128xf32>
    %c10_92 = arith.constant 10 : index
    %233 = memref.load %arg2[%c10_92] : memref<32xf32, #tpu.memory_space<smem>>
    %234 = vector.broadcast %233 : f32 to vector<2x128xf32>
    %235 = arith.mulf %181, %234 : vector<2x128xf32>
    %236 = arith.addf %232, %235 : vector<2x128xf32>
    %c11_93 = arith.constant 11 : index
    %237 = memref.load %arg2[%c11_93] : memref<32xf32, #tpu.memory_space<smem>>
    %238 = vector.broadcast %237 : f32 to vector<2x128xf32>
    %239 = arith.mulf %183, %238 : vector<2x128xf32>
    %240 = arith.addf %236, %239 : vector<2x128xf32>
    %c2_94 = arith.constant 2 : index
    %241 = memref.load %arg3[%c2_94] : memref<8xf32, #tpu.memory_space<smem>>
    %242 = vector.broadcast %241 : f32 to vector<2x128xf32>
    %243 = arith.addf %240, %242 : vector<2x128xf32>
    %c1_95 = arith.constant 1 : index
    %c2_96 = arith.constant 2 : index
    %c0_97 = arith.constant 0 : index
    %c0_98 = arith.constant 0 : index
    %244 = vector.load %arg5[%c1_95, %c2_96, %c0_97, %c0_98] : memref<2x8x2x128xf32, #tpu.memory_space<vmem>>, vector<1x1x2x128xf32>
    %245 = vector.shape_cast %244 : vector<1x1x2x128xf32> to vector<2x128xf32>
    %246 = vector.shape_cast %243 : vector<2x128xf32> to vector<1x1x2x128xf32>
    tpu.vector_store %arg5[%c1_95, %c2_96, %c0_97, %c0_98], %246 {strides = array<i32>} : memref<2x8x2x128xf32, #tpu.memory_space<vmem>>, vector<1x1x2x128xf32>,
    %c12_99 = arith.constant 12 : index
    %247 = memref.load %arg2[%c12_99] : memref<32xf32, #tpu.memory_space<smem>>
    %248 = vector.broadcast %247 : f32 to vector<2x128xf32>
    %249 = arith.mulf %177, %248 : vector<2x128xf32>
    %c13_100 = arith.constant 13 : index
    %250 = memref.load %arg2[%c13_100] : memref<32xf32, #tpu.memory_space<smem>>
    %251 = vector.broadcast %250 : f32 to vector<2x128xf32>
    %252 = arith.mulf %179, %251 : vector<2x128xf32>
    %253 = arith.addf %249, %252 : vector<2x128xf32>
    %c14_101 = arith.constant 14 : index
    %254 = memref.load %arg2[%c14_101] : memref<32xf32, #tpu.memory_space<smem>>
    %255 = vector.broadcast %254 : f32 to vector<2x128xf32>
    %256 = arith.mulf %181, %255 : vector<2x128xf32>
    %257 = arith.addf %253, %256 : vector<2x128xf32>
    %c15_102 = arith.constant 15 : index
    %258 = memref.load %arg2[%c15_102] : memref<32xf32, #tpu.memory_space<smem>>
    %259 = vector.broadcast %258 : f32 to vector<2x128xf32>
    %260 = arith.mulf %183, %259 : vector<2x128xf32>
    %261 = arith.addf %257, %260 : vector<2x128xf32>
    %c3_103 = arith.constant 3 : index
    %262 = memref.load %arg3[%c3_103] : memref<8xf32, #tpu.memory_space<smem>>
    %263 = vector.broadcast %262 : f32 to vector<2x128xf32>
    %264 = arith.addf %261, %263 : vector<2x128xf32>
    %c1_104 = arith.constant 1 : index
    %c3_105 = arith.constant 3 : index
    %c0_106 = arith.constant 0 : index
    %c0_107 = arith.constant 0 : index
    %265 = vector.load %arg5[%c1_104, %c3_105, %c0_106, %c0_107] : memref<2x8x2x128xf32, #tpu.memory_space<vmem>>, vector<1x1x2x128xf32>
    %266 = vector.shape_cast %265 : vector<1x1x2x128xf32> to vector<2x128xf32>
    %267 = vector.shape_cast %264 : vector<2x128xf32> to vector<1x1x2x128xf32>
    tpu.vector_store %arg5[%c1_104, %c3_105, %c0_106, %c0_107], %267 {strides = array<i32>} : memref<2x8x2x128xf32, #tpu.memory_space<vmem>>, vector<1x1x2x128xf32>,
    %c16_108 = arith.constant 16 : index
    %268 = memref.load %arg2[%c16_108] : memref<32xf32, #tpu.memory_space<smem>>
    %269 = vector.broadcast %268 : f32 to vector<2x128xf32>
    %270 = arith.mulf %177, %269 : vector<2x128xf32>
    %c17_109 = arith.constant 17 : index
    %271 = memref.load %arg2[%c17_109] : memref<32xf32, #tpu.memory_space<smem>>
    %272 = vector.broadcast %271 : f32 to vector<2x128xf32>
    %273 = arith.mulf %179, %272 : vector<2x128xf32>
    %274 = arith.addf %270, %273 : vector<2x128xf32>
    %c18_110 = arith.constant 18 : index
    %275 = memref.load %arg2[%c18_110] : memref<32xf32, #tpu.memory_space<smem>>
    %276 = vector.broadcast %275 : f32 to vector<2x128xf32>
    %277 = arith.mulf %181, %276 : vector<2x128xf32>
    %278 = arith.addf %274, %277 : vector<2x128xf32>
    %c19_111 = arith.constant 19 : index
    %279 = memref.load %arg2[%c19_111] : memref<32xf32, #tpu.memory_space<smem>>
    %280 = vector.broadcast %279 : f32 to vector<2x128xf32>
    %281 = arith.mulf %183, %280 : vector<2x128xf32>
    %282 = arith.addf %278, %281 : vector<2x128xf32>
    %c4_112 = arith.constant 4 : index
    %283 = memref.load %arg3[%c4_112] : memref<8xf32, #tpu.memory_space<smem>>
    %284 = vector.broadcast %283 : f32 to vector<2x128xf32>
    %285 = arith.addf %282, %284 : vector<2x128xf32>
    %c1_113 = arith.constant 1 : index
    %c4_114 = arith.constant 4 : index
    %c0_115 = arith.constant 0 : index
    %c0_116 = arith.constant 0 : index
    %286 = vector.load %arg5[%c1_113, %c4_114, %c0_115, %c0_116] : memref<2x8x2x128xf32, #tpu.memory_space<vmem>>, vector<1x1x2x128xf32>
    %287 = vector.shape_cast %286 : vector<1x1x2x128xf32> to vector<2x128xf32>
    %288 = vector.shape_cast %285 : vector<2x128xf32> to vector<1x1x2x128xf32>
    tpu.vector_store %arg5[%c1_113, %c4_114, %c0_115, %c0_116], %288 {strides = array<i32>} : memref<2x8x2x128xf32, #tpu.memory_space<vmem>>, vector<1x1x2x128xf32>,
    %c20_117 = arith.constant 20 : index
    %289 = memref.load %arg2[%c20_117] : memref<32xf32, #tpu.memory_space<smem>>
    %290 = vector.broadcast %289 : f32 to vector<2x128xf32>
    %291 = arith.mulf %177, %290 : vector<2x128xf32>
    %c21_118 = arith.constant 21 : index
    %292 = memref.load %arg2[%c21_118] : memref<32xf32, #tpu.memory_space<smem>>
    %293 = vector.broadcast %292 : f32 to vector<2x128xf32>
    %294 = arith.mulf %179, %293 : vector<2x128xf32>
    %295 = arith.addf %291, %294 : vector<2x128xf32>
    %c22_119 = arith.constant 22 : index
    %296 = memref.load %arg2[%c22_119] : memref<32xf32, #tpu.memory_space<smem>>
    %297 = vector.broadcast %296 : f32 to vector<2x128xf32>
    %298 = arith.mulf %181, %297 : vector<2x128xf32>
    %299 = arith.addf %295, %298 : vector<2x128xf32>
    %c23_120 = arith.constant 23 : index
    %300 = memref.load %arg2[%c23_120] : memref<32xf32, #tpu.memory_space<smem>>
    %301 = vector.broadcast %300 : f32 to vector<2x128xf32>
    %302 = arith.mulf %183, %301 : vector<2x128xf32>
    %303 = arith.addf %299, %302 : vector<2x128xf32>
    %c5_121 = arith.constant 5 : index
    %304 = memref.load %arg3[%c5_121] : memref<8xf32, #tpu.memory_space<smem>>
    %305 = vector.broadcast %304 : f32 to vector<2x128xf32>
    %306 = arith.addf %303, %305 : vector<2x128xf32>
    %c1_122 = arith.constant 1 : index
    %c5_123 = arith.constant 5 : index
    %c0_124 = arith.constant 0 : index
    %c0_125 = arith.constant 0 : index
    %307 = vector.load %arg5[%c1_122, %c5_123, %c0_124, %c0_125] : memref<2x8x2x128xf32, #tpu.memory_space<vmem>>, vector<1x1x2x128xf32>
    %308 = vector.shape_cast %307 : vector<1x1x2x128xf32> to vector<2x128xf32>
    %309 = vector.shape_cast %306 : vector<2x128xf32> to vector<1x1x2x128xf32>
    tpu.vector_store %arg5[%c1_122, %c5_123, %c0_124, %c0_125], %309 {strides = array<i32>} : memref<2x8x2x128xf32, #tpu.memory_space<vmem>>, vector<1x1x2x128xf32>,
    %c24_126 = arith.constant 24 : index
    %310 = memref.load %arg2[%c24_126] : memref<32xf32, #tpu.memory_space<smem>>
    %311 = vector.broadcast %310 : f32 to vector<2x128xf32>
    %312 = arith.mulf %177, %311 : vector<2x128xf32>
    %c25_127 = arith.constant 25 : index
    %313 = memref.load %arg2[%c25_127] : memref<32xf32, #tpu.memory_space<smem>>
    %314 = vector.broadcast %313 : f32 to vector<2x128xf32>
    %315 = arith.mulf %179, %314 : vector<2x128xf32>
    %316 = arith.addf %312, %315 : vector<2x128xf32>
    %c26_128 = arith.constant 26 : index
    %317 = memref.load %arg2[%c26_128] : memref<32xf32, #tpu.memory_space<smem>>
    %318 = vector.broadcast %317 : f32 to vector<2x128xf32>
    %319 = arith.mulf %181, %318 : vector<2x128xf32>
    %320 = arith.addf %316, %319 : vector<2x128xf32>
    %c27_129 = arith.constant 27 : index
    %321 = memref.load %arg2[%c27_129] : memref<32xf32, #tpu.memory_space<smem>>
    %322 = vector.broadcast %321 : f32 to vector<2x128xf32>
    %323 = arith.mulf %183, %322 : vector<2x128xf32>
    %324 = arith.addf %320, %323 : vector<2x128xf32>
    %c6_130 = arith.constant 6 : index
    %325 = memref.load %arg3[%c6_130] : memref<8xf32, #tpu.memory_space<smem>>
    %326 = vector.broadcast %325 : f32 to vector<2x128xf32>
    %327 = arith.addf %324, %326 : vector<2x128xf32>
    %c1_131 = arith.constant 1 : index
    %c6_132 = arith.constant 6 : index
    %c0_133 = arith.constant 0 : index
    %c0_134 = arith.constant 0 : index
    %328 = vector.load %arg5[%c1_131, %c6_132, %c0_133, %c0_134] : memref<2x8x2x128xf32, #tpu.memory_space<vmem>>, vector<1x1x2x128xf32>
    %329 = vector.shape_cast %328 : vector<1x1x2x128xf32> to vector<2x128xf32>
    %330 = vector.shape_cast %327 : vector<2x128xf32> to vector<1x1x2x128xf32>
    tpu.vector_store %arg5[%c1_131, %c6_132, %c0_133, %c0_134], %330 {strides = array<i32>} : memref<2x8x2x128xf32, #tpu.memory_space<vmem>>, vector<1x1x2x128xf32>,
    %c28_135 = arith.constant 28 : index
    %331 = memref.load %arg2[%c28_135] : memref<32xf32, #tpu.memory_space<smem>>
    %332 = vector.broadcast %331 : f32 to vector<2x128xf32>
    %333 = arith.mulf %177, %332 : vector<2x128xf32>
    %c29_136 = arith.constant 29 : index
    %334 = memref.load %arg2[%c29_136] : memref<32xf32, #tpu.memory_space<smem>>
    %335 = vector.broadcast %334 : f32 to vector<2x128xf32>
    %336 = arith.mulf %179, %335 : vector<2x128xf32>
    %337 = arith.addf %333, %336 : vector<2x128xf32>
    %c30_137 = arith.constant 30 : index
    %338 = memref.load %arg2[%c30_137] : memref<32xf32, #tpu.memory_space<smem>>
    %339 = vector.broadcast %338 : f32 to vector<2x128xf32>
    %340 = arith.mulf %181, %339 : vector<2x128xf32>
    %341 = arith.addf %337, %340 : vector<2x128xf32>
    %c31_138 = arith.constant 31 : index
    %342 = memref.load %arg2[%c31_138] : memref<32xf32, #tpu.memory_space<smem>>
    %343 = vector.broadcast %342 : f32 to vector<2x128xf32>
    %344 = arith.mulf %183, %343 : vector<2x128xf32>
    %345 = arith.addf %341, %344 : vector<2x128xf32>
    %c7_139 = arith.constant 7 : index
    %346 = memref.load %arg3[%c7_139] : memref<8xf32, #tpu.memory_space<smem>>
    %347 = vector.broadcast %346 : f32 to vector<2x128xf32>
    %348 = arith.addf %345, %347 : vector<2x128xf32>
    %c1_140 = arith.constant 1 : index
    %c7_141 = arith.constant 7 : index
    %c0_142 = arith.constant 0 : index
    %c0_143 = arith.constant 0 : index
    %349 = vector.load %arg5[%c1_140, %c7_141, %c0_142, %c0_143] : memref<2x8x2x128xf32, #tpu.memory_space<vmem>>, vector<1x1x2x128xf32>
    %350 = vector.shape_cast %349 : vector<1x1x2x128xf32> to vector<2x128xf32>
    %351 = vector.shape_cast %348 : vector<2x128xf32> to vector<1x1x2x128xf32>
    tpu.vector_store %arg5[%c1_140, %c7_141, %c0_142, %c0_143], %351 {strides = array<i32>} : memref<2x8x2x128xf32, #tpu.memory_space<vmem>>, vector<1x1x2x128xf32>,
    return
  }
  func.func @transform_0(%arg0: i32, %arg1: i32) -> i32 {
    %c0_i32 = arith.constant 0 : i32
    %c0_i32_0 = arith.constant 0 : i32
    return %c0_i32 : i32
  }
  func.func @transform_1(%arg0: i32, %arg1: i32) -> i32 {
    %c0_i32 = arith.constant 0 : i32
    %c0_i32_0 = arith.constant 0 : i32
    return %c0_i32 : i32
  }
  func.func @transform_2(%arg0: i32, %arg1: i32) -> (i32, i32, i32, i32) {
    %c0_i32 = arith.constant 0 : i32
    %c0_i32_0 = arith.constant 0 : i32
    %c0_i32_1 = arith.constant 0 : i32
    return %arg0, %c0_i32, %arg1, %c0_i32_0 : i32, i32, i32, i32
  }
  func.func @transform_3(%arg0: i32, %arg1: i32) -> (i32, i32, i32, i32) {
    %c0_i32 = arith.constant 0 : i32
    %c0_i32_0 = arith.constant 0 : i32
    %c0_i32_1 = arith.constant 0 : i32
    return %arg0, %c0_i32, %arg1, %c0_i32_0 : i32, i32, i32, i32
  }
}

</mosaic_0001>

<llo_original>
// kernel: mlp_conv1x1.1
$region0: #{mlp_conv1x1.1}
  #allocation0 [shape = 'u32[]', space=smem, size = 0x4, offset = 0x4, fixed_abs, tag = 'smem constant byte address 0x4 - core index']
  #allocation1 [shape = 'u32[144,128]{1,0:T(1,128)}', space=vmem, size = 0x12000, scoped, tag = 'internal scratch']
  %s0 = inlined_call_operand.vmem [shape: f32[32], index: 0, kind: input, shape index: {}]
  %s1 = inlined_call_operand.vmem [shape: f32[8], index: 1, kind: input, shape index: {}]
  %s2 = inlined_call_operand.vmem [shape: f32[2,4,2,128], index: 2, kind: input, shape index: {}]
  %s3 = inlined_call_operand.vmem [shape: f32[2,8,2,128], index: 3, kind: output, shape index: {}]
  %s4 = sld [smem:[#allocation0]]
  $region30: #{mlp_conv1x1.1} parent=0
    _
  %s6 = ssub.s32 1, %s4
  %s7 = scalar_select 0, %s6, %s4
  $region1: #{mlp_conv1x1.1} parent=0
    #allocation2 [shape = 'u8[512]{0}', space=smem, size = 0x200, scoped, tag = 'input window, operand 0, single buffered']
    #allocation3 [shape = 's32[1]{0}', space=sflag, size = 0x4, scoped, tag = 'scoped memory for mlp_conv1x1.1']
    #allocation4 [shape = 'u8[512]{0}', space=smem, size = 0x200, scoped, tag = 'input window, operand 1, single buffered']
    #allocation5 [shape = 's32[1]{0}', space=sflag, size = 0x4, scoped, tag = 'scoped memory for mlp_conv1x1.1']
    %8 = vsyncpa [#allocation3], 0
    %9 = vsyncpa [#allocation5], 0
    // Predicated region
    $region2: #{mlp_conv1x1.1} parent=1 // pred_check
      _
    $region3: #{mlp_conv1x1.1} parent=1 // pred_check_branch
      %11 = sbr.rel (0) target = $region5
    $region4: #{mlp_conv1x1.1} parent=1 // pred_region
      %s13 = ssub.s32 16, 16
      %14 = vsyncadd [#allocation3], %s13
      %s16 = sshll.u32 %s0, 4
      %s17 = int_to_ptr.vmem [resolvable:$true] %s16
      %19 = dma.vmem_to_smem %s17, 16, [#allocation2], [#allocation3]
    $region5: #{mlp_conv1x1.1} parent=1 // pred_fallthru
      _
    // Predicated region
    $region6: #{mlp_conv1x1.1} parent=1 // pred_check
      _
    $region7: #{mlp_conv1x1.1} parent=1 // pred_check_branch
      %21 = sbr.rel (0) target = $region9
    $region8: #{mlp_conv1x1.1} parent=1 // pred_region
      %s23 = ssub.s32 16, 16
      %24 = vsyncadd [#allocation5], %s23
      %s26 = sshll.u32 %s1, 4
      %s27 = int_to_ptr.vmem [resolvable:$true] %s26
      %29 = dma.vmem_to_smem %s27, 16, [#allocation4], [#allocation5]
    $region9: #{mlp_conv1x1.1} parent=1 // pred_fallthru
      _
    // Predicated region
    $region10: #{mlp_conv1x1.1} parent=1 // pred_check
      _
    $region11: #{mlp_conv1x1.1} parent=1 // pred_check_branch
      %31 = sbr.rel (0) target = $region13
    $region12: #{mlp_conv1x1.1} parent=1 // pred_region
      _
    $region13: #{mlp_conv1x1.1} parent=1 // pred_fallthru
      _
    // Predicated region
    $region14: #{mlp_conv1x1.1} parent=1 // pred_check
      _
    $region15: #{mlp_conv1x1.1} parent=1 // pred_check_branch
      %33 = sbr.rel (0) target = $region17
    $region16: #{mlp_conv1x1.1} parent=1 // pred_region
      %34 = dma.done [#allocation3], 16
    $region17: #{mlp_conv1x1.1} parent=1 // pred_fallthru
      _
    // Predicated region
    $region18: #{mlp_conv1x1.1} parent=1 // pred_check
      _
    $region19: #{mlp_conv1x1.1} parent=1 // pred_check_branch
      %36 = sbr.rel (0) target = $region21
    $region20: #{mlp_conv1x1.1} parent=1 // pred_region
      %37 = dma.done [#allocation5], 16
    $region21: #{mlp_conv1x1.1} parent=1 // pred_fallthru
      _
    %38 = sfence
    %v39 = vld [vmem:[%s2] sm:$0x3]
    %s40 = scalar_lea.vmem %s2, 2
    %v41 = vld [vmem:[%s40] sm:$0x3]
    %s42 = scalar_lea.vmem %s2, 4
    %v43 = vld [vmem:[%s42] sm:$0x3]
    %s44 = scalar_lea.vmem %s2, 6
    %v45 = vld [vmem:[%s44] sm:$0x3]
    %s46 = sld [smem:[#allocation2]]
    %v47 = vstv %s46
    %v48 = vmul.f32 %v39, %v47
    %s49 = sld [smem:[#allocation2 + $0x1]]
    %v50 = vstv %s49
    %v51 = vmul.f32 %v41, %v50
    %v52 = vadd.f32 %v48, %v51
    %s53 = sld [smem:[#allocation2 + $0x2]]
    %v54 = vstv %s53
    %v55 = vmul.f32 %v43, %v54
    %v56 = vadd.f32 %v52, %v55
    %s57 = sld [smem:[#allocation2 + $0x3]]
    %v58 = vstv %s57
    %v59 = vmul.f32 %v45, %v58
    %v60 = vadd.f32 %v56, %v59
    %s61 = sld [smem:[#allocation4]]
    %v62 = vstv %s61
    %v63 = vadd.f32 %v60, %v62
    %64 = vst [vmem:[%s3] sm:$0x3] %v63
    %s65 = sld [smem:[#allocation2 + $0x4]]
    %v66 = vstv %s65
    %v67 = vmul.f32 %v39, %v66
    %s68 = sld [smem:[#allocation2 + $0x5]]
    %v69 = vstv %s68
    %v70 = vmul.f32 %v41, %v69
    %v71 = vadd.f32 %v67, %v70
    %s72 = sld [smem:[#allocation2 + $0x6]]
    %v73 = vstv %s72
    %v74 = vmul.f32 %v43, %v73
    %v75 = vadd.f32 %v71, %v74
    %s76 = sld [smem:[#allocation2 + $0x7]]
    %v77 = vstv %s76
    %v78 = vmul.f32 %v45, %v77
    %v79 = vadd.f32 %v75, %v78
    %s80 = sld [smem:[#allocation4 + $0x1]]
    %v81 = vstv %s80
    %v82 = vadd.f32 %v79, %v81
    %s83 = scalar_lea.vmem %s3, 2
    %84 = vst [vmem:[%s83] sm:$0x3] %v82
    %s85 = sld [smem:[#allocation2 + $0x8]]
    %v86 = vstv %s85
    %v87 = vmul.f32 %v39, %v86
    %s88 = sld [smem:[#allocation2 + $0x9]]
    %v89 = vstv %s88
    %v90 = vmul.f32 %v41, %v89
    %v91 = vadd.f32 %v87, %v90
    %s92 = sld [smem:[#allocation2 + $0xa]]
    %v93 = vstv %s92
    %v94 = vmul.f32 %v43, %v93
    %v95 = vadd.f32 %v91, %v94
    %s96 = sld [smem:[#allocation2 + $0xb]]
    %v97 = vstv %s96
    %v98 = vmul.f32 %v45, %v97
    %v99 = vadd.f32 %v95, %v98
    %s100 = sld [smem:[#allocation4 + $0x2]]
    %v101 = vstv %s100
    %v102 = vadd.f32 %v99, %v101
    %s103 = scalar_lea.vmem %s3, 4
    %104 = vst [vmem:[%s103] sm:$0x3] %v102
    %s105 = sld [smem:[#allocation2 + $0xc]]
    %v106 = vstv %s105
    %v107 = vmul.f32 %v39, %v106
    %s108 = sld [smem:[#allocation2 + $0xd]]
    %v109 = vstv %s108
    %v110 = vmul.f32 %v41, %v109
    %v111 = vadd.f32 %v107, %v110
    %s112 = sld [smem:[#allocation2 + $0xe]]
    %v113 = vstv %s112
    %v114 = vmul.f32 %v43, %v113
    %v115 = vadd.f32 %v111, %v114
    %s116 = sld [smem:[#allocation2 + $0xf]]
    %v117 = vstv %s116
    %v118 = vmul.f32 %v45, %v117
    %v119 = vadd.f32 %v115, %v118
    %s120 = sld [smem:[#allocation4 + $0x3]]
    %v121 = vstv %s120
    %v122 = vadd.f32 %v119, %v121
    %s123 = scalar_lea.vmem %s3, 6
    %124 = vst [vmem:[%s123] sm:$0x3] %v122
    %s125 = sld [smem:[#allocation2 + $0x10]]
    %v126 = vstv %s125
    %v127 = vmul.f32 %v39, %v126
    %s128 = sld [smem:[#allocation2 + $0x11]]
    %v129 = vstv %s128
    %v130 = vmul.f32 %v41, %v129
    %v131 = vadd.f32 %v127, %v130
    %s132 = sld [smem:[#allocation2 + $0x12]]
    %v133 = vstv %s132
    %v134 = vmul.f32 %v43, %v133
    %v135 = vadd.f32 %v131, %v134
    %s136 = sld [smem:[#allocation2 + $0x13]]
    %v137 = vstv %s136
    %v138 = vmul.f32 %v45, %v137
    %v139 = vadd.f32 %v135, %v138
    %s140 = sld [smem:[#allocation4 + $0x4]]
    %v141 = vstv %s140
    %v142 = vadd.f32 %v139, %v141
    %s143 = scalar_lea.vmem %s3, 8
    %144 = vst [vmem:[%s143] sm:$0x3] %v142
    %s145 = sld [smem:[#allocation2 + $0x14]]
    %v146 = vstv %s145
    %v147 = vmul.f32 %v39, %v146
    %s148 = sld [smem:[#allocation2 + $0x15]]
    %v149 = vstv %s148
    %v150 = vmul.f32 %v41, %v149
    %v151 = vadd.f32 %v147, %v150
    %s152 = sld [smem:[#allocation2 + $0x16]]
    %v153 = vstv %s152
    %v154 = vmul.f32 %v43, %v153
    %v155 = vadd.f32 %v151, %v154
    %s156 = sld [smem:[#allocation2 + $0x17]]
    %v157 = vstv %s156
    %v158 = vmul.f32 %v45, %v157
    %v159 = vadd.f32 %v155, %v158
    %s160 = sld [smem:[#allocation4 + $0x5]]
    %v161 = vstv %s160
    %v162 = vadd.f32 %v159, %v161
    %s163 = scalar_lea.vmem %s3, 10
    %164 = vst [vmem:[%s163] sm:$0x3] %v162
    %s165 = sld [smem:[#allocation2 + $0x18]]
    %v166 = vstv %s165
    %v167 = vmul.f32 %v39, %v166
    %s168 = sld [smem:[#allocation2 + $0x19]]
    %v169 = vstv %s168
    %v170 = vmul.f32 %v41, %v169
    %v171 = vadd.f32 %v167, %v170
    %s172 = sld [smem:[#allocation2 + $0x1a]]
    %v173 = vstv %s172
    %v174 = vmul.f32 %v43, %v173
    %v175 = vadd.f32 %v171, %v174
    %s176 = sld [smem:[#allocation2 + $0x1b]]
    %v177 = vstv %s176
    %v178 = vmul.f32 %v45, %v177
    %v179 = vadd.f32 %v175, %v178
    %s180 = sld [smem:[#allocation4 + $0x6]]
    %v181 = vstv %s180
    %v182 = vadd.f32 %v179, %v181
    %s183 = scalar_lea.vmem %s3, 12
    %184 = vst [vmem:[%s183] sm:$0x3] %v182
    %s185 = sld [smem:[#allocation2 + $0x1c]]
    %v186 = vstv %s185
    %v187 = vmul.f32 %v39, %v186
    %s188 = sld [smem:[#allocation2 + $0x1d]]
    %v189 = vstv %s188
    %v190 = vmul.f32 %v41, %v189
    %v191 = vadd.f32 %v187, %v190
    %s192 = sld [smem:[#allocation2 + $0x1e]]
    %v193 = vstv %s192
    %v194 = vmul.f32 %v43, %v193
    %v195 = vadd.f32 %v191, %v194
    %s196 = sld [smem:[#allocation2 + $0x1f]]
    %v197 = vstv %s196
    %v198 = vmul.f32 %v45, %v197
    %v199 = vadd.f32 %v195, %v198
    %s200 = sld [smem:[#allocation4 + $0x7]]
    %v201 = vstv %s200
    %v202 = vadd.f32 %v199, %v201
    %s203 = scalar_lea.vmem %s3, 14
    %204 = vst [vmem:[%s203] sm:$0x3] %v202
    %s205 = scalar_lea.vmem %s2, 8
    %v206 = vld [vmem:[%s205] sm:$0x3]
    %s207 = scalar_lea.vmem %s2, 10
    %v208 = vld [vmem:[%s207] sm:$0x3]
    %s209 = scalar_lea.vmem %s2, 12
    %v210 = vld [vmem:[%s209] sm:$0x3]
    %s211 = scalar_lea.vmem %s2, 14
    %v212 = vld [vmem:[%s211] sm:$0x3]
    %s213 = sld [smem:[#allocation2]]
    %v214 = vstv %s213
    %v215 = vmul.f32 %v206, %v214
    %s216 = sld [smem:[#allocation2 + $0x1]]
    %v217 = vstv %s216
    %v218 = vmul.f32 %v208, %v217
    %v219 = vadd.f32 %v215, %v218
    %s220 = sld [smem:[#allocation2 + $0x2]]
    %v221 = vstv %s220
    %v222 = vmul.f32 %v210, %v221
    %v223 = vadd.f32 %v219, %v222
    %s224 = sld [smem:[#allocation2 + $0x3]]
    %v225 = vstv %s224
    %v226 = vmul.f32 %v212, %v225
    %v227 = vadd.f32 %v223, %v226
    %s228 = sld [smem:[#allocation4]]
    %v229 = vstv %s228
    %v230 = vadd.f32 %v227, %v229
    %s231 = scalar_lea.vmem %s3, 16
    %232 = vst [vmem:[%s231] sm:$0x3] %v230
    %s233 = sld [smem:[#allocation2 + $0x4]]
    %v234 = vstv %s233
    %v235 = vmul.f32 %v206, %v234
    %s236 = sld [smem:[#allocation2 + $0x5]]
    %v237 = vstv %s236
    %v238 = vmul.f32 %v208, %v237
    %v239 = vadd.f32 %v235, %v238
    %s240 = sld [smem:[#allocation2 + $0x6]]
    %v241 = vstv %s240
    %v242 = vmul.f32 %v210, %v241
    %v243 = vadd.f32 %v239, %v242
    %s244 = sld [smem:[#allocation2 + $0x7]]
    %v245 = vstv %s244
    %v246 = vmul.f32 %v212, %v245
    %v247 = vadd.f32 %v243, %v246
    %s248 = sld [smem:[#allocation4 + $0x1]]
    %v249 = vstv %s248
    %v250 = vadd.f32 %v247, %v249
    %s251 = scalar_lea.vmem %s3, 18
    %252 = vst [vmem:[%s251] sm:$0x3] %v250
    %s253 = sld [smem:[#allocation2 + $0x8]]
    %v254 = vstv %s253
    %v255 = vmul.f32 %v206, %v254
    %s256 = sld [smem:[#allocation2 + $0x9]]
    %v257 = vstv %s256
    %v258 = vmul.f32 %v208, %v257
    %v259 = vadd.f32 %v255, %v258
    %s260 = sld [smem:[#allocation2 + $0xa]]
    %v261 = vstv %s260
    %v262 = vmul.f32 %v210, %v261
    %v263 = vadd.f32 %v259, %v262
    %s264 = sld [smem:[#allocation2 + $0xb]]
    %v265 = vstv %s264
    %v266 = vmul.f32 %v212, %v265
    %v267 = vadd.f32 %v263, %v266
    %s268 = sld [smem:[#allocation4 + $0x2]]
    %v269 = vstv %s268
    %v270 = vadd.f32 %v267, %v269
    %s271 = scalar_lea.vmem %s3, 20
    %272 = vst [vmem:[%s271] sm:$0x3] %v270
    %s273 = sld [smem:[#allocation2 + $0xc]]
    %v274 = vstv %s273
    %v275 = vmul.f32 %v206, %v274
    %s276 = sld [smem:[#allocation2 + $0xd]]
    %v277 = vstv %s276
    %v278 = vmul.f32 %v208, %v277
    %v279 = vadd.f32 %v275, %v278
    %s280 = sld [smem:[#allocation2 + $0xe]]
    %v281 = vstv %s280
    %v282 = vmul.f32 %v210, %v281
    %v283 = vadd.f32 %v279, %v282
    %s284 = sld [smem:[#allocation2 + $0xf]]
    %v285 = vstv %s284
    %v286 = vmul.f32 %v212, %v285
    %v287 = vadd.f32 %v283, %v286
    %s288 = sld [smem:[#allocation4 + $0x3]]
    %v289 = vstv %s288
    %v290 = vadd.f32 %v287, %v289
    %s291 = scalar_lea.vmem %s3, 22
    %292 = vst [vmem:[%s291] sm:$0x3] %v290
    %s293 = sld [smem:[#allocation2 + $0x10]]
    %v294 = vstv %s293
    %v295 = vmul.f32 %v206, %v294
    %s296 = sld [smem:[#allocation2 + $0x11]]
    %v297 = vstv %s296
    %v298 = vmul.f32 %v208, %v297
    %v299 = vadd.f32 %v295, %v298
    %s300 = sld [smem:[#allocation2 + $0x12]]
    %v301 = vstv %s300
    %v302 = vmul.f32 %v210, %v301
    %v303 = vadd.f32 %v299, %v302
    %s304 = sld [smem:[#allocation2 + $0x13]]
    %v305 = vstv %s304
    %v306 = vmul.f32 %v212, %v305
    %v307 = vadd.f32 %v303, %v306
    %s308 = sld [smem:[#allocation4 + $0x4]]
    %v309 = vstv %s308
    %v310 = vadd.f32 %v307, %v309
    %s311 = scalar_lea.vmem %s3, 24
    %312 = vst [vmem:[%s311] sm:$0x3] %v310
    %s313 = sld [smem:[#allocation2 + $0x14]]
    %v314 = vstv %s313
    %v315 = vmul.f32 %v206, %v314
    %s316 = sld [smem:[#allocation2 + $0x15]]
    %v317 = vstv %s316
    %v318 = vmul.f32 %v208, %v317
    %v319 = vadd.f32 %v315, %v318
    %s320 = sld [smem:[#allocation2 + $0x16]]
    %v321 = vstv %s320
    %v322 = vmul.f32 %v210, %v321
    %v323 = vadd.f32 %v319, %v322
    %s324 = sld [smem:[#allocation2 + $0x17]]
    %v325 = vstv %s324
    %v326 = vmul.f32 %v212, %v325
    %v327 = vadd.f32 %v323, %v326
    %s328 = sld [smem:[#allocation4 + $0x5]]
    %v329 = vstv %s328
    %v330 = vadd.f32 %v327, %v329
    %s331 = scalar_lea.vmem %s3, 26
    %332 = vst [vmem:[%s331] sm:$0x3] %v330
    %s333 = sld [smem:[#allocation2 + $0x18]]
    %v334 = vstv %s333
    %v335 = vmul.f32 %v206, %v334
    %s336 = sld [smem:[#allocation2 + $0x19]]
    %v337 = vstv %s336
    %v338 = vmul.f32 %v208, %v337
    %v339 = vadd.f32 %v335, %v338
    %s340 = sld [smem:[#allocation2 + $0x1a]]
    %v341 = vstv %s340
    %v342 = vmul.f32 %v210, %v341
    %v343 = vadd.f32 %v339, %v342
    %s344 = sld [smem:[#allocation2 + $0x1b]]
    %v345 = vstv %s344
    %v346 = vmul.f32 %v212, %v345
    %v347 = vadd.f32 %v343, %v346
    %s348 = sld [smem:[#allocation4 + $0x6]]
    %v349 = vstv %s348
    %v350 = vadd.f32 %v347, %v349
    %s351 = scalar_lea.vmem %s3, 28
    %352 = vst [vmem:[%s351] sm:$0x3] %v350
    %s353 = sld [smem:[#allocation2 + $0x1c]]
    %v354 = vstv %s353
    %v355 = vmul.f32 %v206, %v354
    %s356 = sld [smem:[#allocation2 + $0x1d]]
    %v357 = vstv %s356
    %v358 = vmul.f32 %v208, %v357
    %v359 = vadd.f32 %v355, %v358
    %s360 = sld [smem:[#allocation2 + $0x1e]]
    %v361 = vstv %s360
    %v362 = vmul.f32 %v210, %v361
    %v363 = vadd.f32 %v359, %v362
    %s364 = sld [smem:[#allocation2 + $0x1f]]
    %v365 = vstv %s364
    %v366 = vmul.f32 %v212, %v365
    %v367 = vadd.f32 %v363, %v366
    %s368 = sld [smem:[#allocation4 + $0x7]]
    %v369 = vstv %s368
    %v370 = vadd.f32 %v367, %v369
    %s371 = scalar_lea.vmem %s3, 30
    %372 = vst [vmem:[%s371] sm:$0x3] %v370
    // Predicated region
    $region22: #{mlp_conv1x1.1} parent=1 // pred_check
      _
    $region23: #{mlp_conv1x1.1} parent=1 // pred_check_branch
      %374 = sbr.rel (0) target = $region25
    $region24: #{mlp_conv1x1.1} parent=1 // pred_region
      _
    $region25: #{mlp_conv1x1.1} parent=1 // pred_fallthru
      _
    // Predicated region
    $region26: #{mlp_conv1x1.1} parent=1 // pred_check
      _
    $region27: #{mlp_conv1x1.1} parent=1 // pred_check_branch
      %376 = sbr.rel (0) target = $region29
    $region28: #{mlp_conv1x1.1} parent=1 // pred_region
      _
    $region29: #{mlp_conv1x1.1} parent=1 // pred_fallthru
      _
    %377 = vsyncpa [#allocation3], 1
    %378 = vsyncpa [#allocation5], 1

</llo_original>
